<compile_context>
chip_gen: v5e
topology: v5e:2x2
jax: 0.10.0
libtpu: 0.0.40
codegen_flags: <defaults>
</compile_context>

<pallas_src>
import jax
import jax.numpy as jnp
from jax import lax
from jax.experimental import pallas as pl
from jax.experimental.pallas import tpu as pltpu


def _make_moving_average_kernel(window_size: int, l_out: int):
    def kernel(x_ref, o_ref):
        # x_ref: (1, L, TD), o_ref: (1, l_out, TD)
        inv_w = jnp.float32(1.0 / window_size)
        acc = x_ref[:, 0:l_out, :].astype(jnp.float32)
        if window_size <= 8:
            # Small window: static unrolled shifted adds (W-1 extra vld+vadd).
            for w in range(1, window_size):
                acc = acc + x_ref[:, w:w + l_out, :].astype(jnp.float32)
        else:
            # Larger window: keep one accumulator live, loop over the shift.
            def body(w, a):
                return a + x_ref[:, pl.ds(w, l_out), :].astype(jnp.float32)
            acc = lax.fori_loop(1, window_size, body, acc)
        o_ref[...] = (acc * inv_w).astype(o_ref.dtype)
    return kernel


def _pick_feature_tile(L: int, l_out: int, D: int, itemsize: int,
                       vmem_block_budget_bytes: int = 16 * 1024 * 1024) -> int:
    """Pick a feature-axis tile TD that divides D, is a multiple of 128 when
    possible (lane-dense), and keeps the double-buffered in+out block footprint
    under the given budget (sized for v7x's smaller VMEM)."""
    if D >= 128 and D % 128 == 0:
        candidates = [td for td in (1024, 768, 512, 384, 256, 128) if D % td == 0]
        if not candidates:
            candidates = [128]
    else:
        # D < 128 (or not 128-aligned): fall back to full-D blocks.
        # TODO(synk): for D < 128 a wrapper-side reshape folding D into the
        # lane axis would avoid masked partial stores.
        candidates = [D]
    for td in candidates:
        block_bytes = 2 * (L + l_out) * td * itemsize  # double-buffered in + out
        if block_bytes <= vmem_block_budget_bytes:
            return td
    return candidates[-1]


def moving_average(x: jnp.ndarray, window_size: int, dimension: int = 1) -> jnp.ndarray:
    """Pallas moving average along axis 1 of a (B, L, D) tensor."""
    assert dimension == 1, "kernel implements the (B, L, D) / dim=1 case of the module"
    B, L, D = x.shape
    l_out = L - window_size + 1
    assert l_out >= 1, "window_size must be <= sequence length"

    itemsize = jnp.dtype(x.dtype).itemsize
    TD = _pick_feature_tile(L, l_out, D, itemsize)
    assert D % TD == 0
    n_d_tiles = D // TD

    # Double-buffered in+out blocks, plus headroom; stays within scoped limits
    # on all generations for the tile budget chosen above.
    block_bytes = 2 * (L + l_out) * TD * itemsize
    vmem_limit = int(min(96 * 1024 * 1024,
                         max(32 * 1024 * 1024, 2 * block_bytes + (8 << 20))))

    kernel = _make_moving_average_kernel(window_size, l_out)

    cost = pl.CostEstimate(
        flops=int(window_size) * B * l_out * D,
        bytes_accessed=itemsize * B * (L * D + l_out * D),
        transcendentals=0,
    )

    return pl.pallas_call(
        kernel,
        out_shape=jax.ShapeDtypeStruct((B, l_out, D), x.dtype),
        grid_spec=pltpu.PrefetchScalarGridSpec(
            num_scalar_prefetch=0,
            grid=(B, n_d_tiles),
            in_specs=[pl.BlockSpec((1, L, TD), lambda b, d: (b, 0, d))],
            out_specs=pl.BlockSpec((1, l_out, TD), lambda b, d: (b, 0, d)),
        ),
        compiler_params=pltpu.CompilerParams(
            dimension_semantics=("parallel", "parallel"),
            vmem_limit_bytes=vmem_limit,
        ),
        cost_estimate=cost,
    )(x)


def moving_average_ref(x: jnp.ndarray, window_size: int) -> jnp.ndarray:
    """Pure-JAX reference mirroring the PyTorch cumsum-diff formulation."""
    ret = jnp.cumsum(x.astype(jnp.float32), axis=1)
    upper = ret[:, window_size:] - ret[:, :-window_size]
    ret = jnp.concatenate([ret[:, :window_size], upper], axis=1)
    return (ret[:, window_size - 1:] / window_size).astype(x.dtype)


if __name__ == "__main__":
    window_size = 4
    dimension = 1  # the module slices along axis 1

    # Small but lane-dense demo shapes: D a multiple of 128 so output stores
    # are unmasked full-vreg stores.
    B, L, D = 2, 16, 128
    key = jax.random.PRNGKey(0)
    x = jax.random.normal(key, (B, L, D), dtype=jnp.float32)

    out = moving_average(x, window_size, dimension)
    out = jax.block_until_ready(out)

    ref = moving_average_ref(x, window_size)
    assert out.shape == (B, L - window_size + 1, D), out.shape
    assert jnp.allclose(out, ref, atol=1e-5, rtol=1e-5), float(jnp.max(jnp.abs(out - ref)))

    # Also exercise the non-128-aligned fallback path and the large-W loop path.
    B2, L2, D2, W2 = 2, 64, 32, 12
    x2 = jax.random.normal(jax.random.PRNGKey(1), (B2, L2, D2), dtype=jnp.float32)
    out2 = jax.block_until_ready(moving_average(x2, W2, dimension))
    ref2 = moving_average_ref(x2, W2)
    assert out2.shape == (B2, L2 - W2 + 1, D2), out2.shape
    assert jnp.allclose(out2, ref2, atol=1e-4, rtol=1e-4), float(jnp.max(jnp.abs(out2 - ref2)))

    print("KERNEL_OK")
</pallas_src>

<mosaic_0001>
module attributes {stable_mosaic.version = 11 : i64} {
  func.func @kernel(%arg0: i32, %arg1: i32, %arg2: memref<1x16x128xf32, #tpu.memory_space<vmem>>, %arg3: memref<1x13x128xf32, #tpu.memory_space<vmem>>) attributes {dimension_semantics = [#tpu.dimension_semantics<parallel>, #tpu.dimension_semantics<parallel>], iteration_bounds = array<i64: 2, 1>, scalar_prefetch = 0 : i64, scratch_operands = 0 : i64, tpu.core_type = #tpu.core_type<tc>, window_params = [{transform_indices = @transform_0, window_bounds = array<i64: 1, 16, 128>}, {transform_indices = @transform_1, window_bounds = array<i64: 1, 13, 128>}]} {
    %c0 = arith.constant 0 : index
    %c0_0 = arith.constant 0 : index
    %c0_1 = arith.constant 0 : index
    %0 = vector.load %arg2[%c0, %c0_0, %c0_1] : memref<1x16x128xf32, #tpu.memory_space<vmem>>, vector<1x13x128xf32>
    %c0_2 = arith.constant 0 : index
    %c1 = arith.constant 1 : index
    %c0_3 = arith.constant 0 : index
    %1 = vector.load %arg2[%c0_2, %c1, %c0_3] : memref<1x16x128xf32, #tpu.memory_space<vmem>>, vector<1x13x128xf32>
    %2 = arith.addf %0, %1 : vector<1x13x128xf32>
    %c0_4 = arith.constant 0 : index
    %c2 = arith.constant 2 : index
    %c0_5 = arith.constant 0 : index
    %3 = vector.load %arg2[%c0_4, %c2, %c0_5] : memref<1x16x128xf32, #tpu.memory_space<vmem>>, vector<1x13x128xf32>
    %4 = arith.addf %2, %3 : vector<1x13x128xf32>
    %c0_6 = arith.constant 0 : index
    %c3 = arith.constant 3 : index
    %c0_7 = arith.constant 0 : index
    %5 = vector.load %arg2[%c0_6, %c3, %c0_7] : memref<1x16x128xf32, #tpu.memory_space<vmem>>, vector<1x13x128xf32>
    %6 = arith.addf %4, %5 : vector<1x13x128xf32>
    %cst = arith.constant 2.500000e-01 : f32
    %7 = vector.broadcast %cst : f32 to vector<1x13x128xf32>
    %8 = arith.mulf %6, %7 : vector<1x13x128xf32>
    %c0_8 = arith.constant 0 : index
    %c0_9 = arith.constant 0 : index
    %c0_10 = arith.constant 0 : index
    %9 = vector.load %arg3[%c0_8, %c0_9, %c0_10] : memref<1x13x128xf32, #tpu.memory_space<vmem>>, vector<1x13x128xf32>
    tpu.vector_store %arg3[%c0_8, %c0_9, %c0_10], %8 {strides = array<i32>} : memref<1x13x128xf32, #tpu.memory_space<vmem>>, vector<1x13x128xf32>,
    return
  }
  func.func @transform_0(%arg0: i32, %arg1: i32) -> (i32, i32, i32) {
    %c0_i32 = arith.constant 0 : i32
    %c0_i32_0 = arith.constant 0 : i32
    return %arg0, %c0_i32, %arg1 : i32, i32, i32
  }
  func.func @transform_1(%arg0: i32, %arg1: i32) -> (i32, i32, i32) {
    %c0_i32 = arith.constant 0 : i32
    %c0_i32_0 = arith.constant 0 : i32
    return %arg0, %c0_i32, %arg1 : i32, i32, i32
  }
}

</mosaic_0001>

<llo_original>
// kernel: tpu_custom_call.1
$region0: #{tpu_custom_call.1}
  #allocation0 [shape = 'u32[]', space=smem, size = 0x4, offset = 0x4, fixed_abs, tag = 'smem constant byte address 0x4 - core index']
  #allocation1 [shape = 'u32[72,128]{1,0:T(1,128)}', space=vmem, size = 0x9000, scoped, tag = 'internal scratch']
  %s0 = inlined_call_operand.hbm [shape: f32[2,16,128], index: 0, kind: input, shape index: {}]
  %s1 = inlined_call_operand.vmem [shape: f32[2,13,128], index: 1, kind: output, shape index: {}]
  %s2 = sld [smem:[#allocation0]]
  $region41: #{tpu_custom_call.1} parent=0
    _
  %s4 = ssub.s32 1, %s2
  %s5 = scalar_select 0, %s4, %s2
  $region1: #{tpu_custom_call.1} parent=0
    #allocation2 [shape = 'u8[16384]{0}', space=vmem, size = 0x4000, scoped, tag = 'input window, operand 0']
    #allocation3 [shape = 's32[2]{0}', space=sflag, size = 0x8, scoped, tag = 'scoped memory for tpu_custom_call.1']
    %6 = vsyncpa [#allocation3], 0
    %s7 = scalar_lea.sflag [#allocation3], 1
    %8 = vsyncpa %s7, 0
    loop: start=0, step=1, limit=4
    $region2: #{tpu_custom_call.1} parent=1 // loop_pre_header
      _
    $region3: #{tpu_custom_call.1} parent=1 // loop_header
      %s10 = sphi 0, %s14
      %p11 = scmp.ge.s32.totalorder %s10, 4
      %s17 = sphi 0, %s29
      %s18 = sphi 0, %s25
      %s19 = sphi 0, %s17
      %s20 = sphi 0, %s18
      %s21 = sphi 0, %s19
      %s22 = sphi 0, %s20
      %s34 = sphi 0, %s36
      %s37 = sphi 0, %s34
      %s38 = sphi 0, %s37
      %s54 = sphi 0, %s38
      %s62 = sphi 0, %s64
      %s65 = sphi 0, %s62
      %s66 = sphi 0, %s65
      %s82 = sphi 0, %s66
    $region4: #{tpu_custom_call.1} parent=1 // loop_header_branch
      %13 = sbr.rel (%p11) target = $region8
    $region5: #{tpu_custom_call.1} parent=1 // loop_body
      %s15 = ssub.s32 %s10, 1
      %s16 = ssub.s32 %s10, 2
      %s23 = sadd.s32 1, %s18
      %p24 = scmp.ge.s32.totalorder %s23, 1
      %s25 = scalar_select %p24, 0, %s23
      %s26 = sadd.s32 1, %s17
      %s27 = scalar_select %p24, %s26, %s17
      %p28 = scmp.ge.s32.totalorder %s27, 2
      %s29 = scalar_select %p28, 0, %s27
      %s30 = ssub.s32 %s17, %s29
      %s31 = ssub.s32 %s18, %s25
      %s32 = sor.u32 %s30, %s31
      %p33 = scmp.eq.s32.totalorder %s32, 0
      %s35 = sadd.s32 %s34, 1
      %s36 = scalar_select %p33, %s34, %s35
      %p39 = pneg %p33
      %p40 = scmp.eq.s32.totalorder %s10, 1
      %p41 = por %p39, %p40
      %p42 = scmp.ne.s32.totalorder %s34, %s37
      %p43 = scmp.eq.s32.totalorder %s10, 0
      %p44 = por %p42, %p43
      %p45 = scmp.ne.s32.totalorder %s34, %s37
      %p46 = scmp.eq.s32.totalorder %s15, 1
      %p47 = por %p45, %p46
      %p48 = scmp.ne.s32.totalorder %s37, %s38
      %p49 = scmp.eq.s32.totalorder %s15, 0
      %p50 = por %p48, %p49
      %p51 = scmp.ne.s32.totalorder %s37, %s38
      %p52 = scmp.eq.s32.totalorder %s16, 1
      %p53 = por %p51, %p52
      %p55 = scmp.ne.s32.totalorder %s38, %s54
      %p56 = scmp.eq.s32.totalorder %s16, 0
      %p57 = por %p55, %p56
      %s58 = ssub.s32 %s17, %s29
      %s59 = ssub.s32 %s18, %s25
      %s60 = sor.u32 %s58, %s59
      %p61 = scmp.eq.s32.totalorder %s60, 0
      %s63 = sadd.s32 %s62, 1
      %s64 = scalar_select %p61, %s62, %s63
      %p67 = pneg %p61
      %p68 = scmp.eq.s32.totalorder %s10, 1
      %p69 = por %p67, %p68
      %p70 = scmp.ne.s32.totalorder %s62, %s65
      %p71 = scmp.eq.s32.totalorder %s10, 0
      %p72 = por %p70, %p71
      %p73 = scmp.ne.s32.totalorder %s62, %s65
      %p74 = scmp.eq.s32.totalorder %s15, 1
      %p75 = por %p73, %p74
      %p76 = scmp.ne.s32.totalorder %s65, %s66
      %p77 = scmp.eq.s32.totalorder %s15, 0
      %p78 = por %p76, %p77
      %p79 = scmp.ne.s32.totalorder %s65, %s66
      %p80 = scmp.eq.s32.totalorder %s16, 1
      %p81 = por %p79, %p80
      %p83 = scmp.ne.s32.totalorder %s66, %s82
      %p84 = scmp.eq.s32.totalorder %s16, 0
      %p85 = por %p83, %p84
      %p86 = scmp.le.s32.totalorder 1, %s10
      %p87 = scmp.lt.s32.totalorder %s10, 3
      %p88 = pnand %p86, %p87
      %p89 = pneg %p88
      // Predicated region
      $region9: #{tpu_custom_call.1} parent=5 // pred_check
        _
      $region10: #{tpu_custom_call.1} parent=5 // pred_check_branch
        %91 = sbr.rel (%p88) target = $region12
      $region11: #{tpu_custom_call.1} parent=5 // pred_region
        %s92 = ssub.s32 %s10, 1
      $region12: #{tpu_custom_call.1} parent=5 // pred_fallthru
        _
      %p93 = scmp.lt.s32.totalorder %s10, 2
      // Predicated region
      $region13: #{tpu_custom_call.1} parent=5 // pred_check
        %p94 = pneg %p93
      $region14: #{tpu_custom_call.1} parent=5 // pred_check_branch
        %96 = sbr.rel (%p94) target = $region16
      $region15: #{tpu_custom_call.1} parent=5 // pred_region
        // Predicated region
        $region17: #{tpu_custom_call.1} parent=15 // pred_check
          %p97 = pneg %p44
        $region18: #{tpu_custom_call.1} parent=15 // pred_check_branch
          %99 = sbr.rel (%p97) target = $region20
        $region19: #{tpu_custom_call.1} parent=15 // pred_region
          %s100 = sand.u32 %s34, 1
          %s101 = scalar_lea.sflag [#allocation3], %s100
          %s102 = sand.u32 %s34, 1
          %s103 = smul.addr %s102, 16
          %s104 = scalar_lea.vmem [#allocation2], %s103
          %106 = vsyncadd %s101, 0
          %s107 = smul.addr %s17, 2
          %s108 = sadd.s32 %s18, %s107
          %s109 = smul.addr %s108, 8
          %s110 = scalar_lea.hbm %s0, %s109
          %s111 = sshll.u32 %s110, 4
          %s112 = int_to_ptr.hbm [resolvable:$true] %s111
          %s113 = sshll.u32 %s104, 4
          %s114 = int_to_ptr.vmem [resolvable:$true] %s113
          %119 = dma.hbm_to_vmem [thread:$0]  %s112, 256, %s114, %s101, 128, 128, 8
        $region20: #{tpu_custom_call.1} parent=15 // pred_fallthru
          _
      $region16: #{tpu_custom_call.1} parent=5 // pred_fallthru
        _
      %p120 = scmp.le.s32.totalorder 1, %s10
      %p121 = scmp.lt.s32.totalorder %s10, 3
      %p122 = pnand %p120, %p121
      %p123 = pneg %p122
      // Predicated region
      $region21: #{tpu_custom_call.1} parent=5 // pred_check
        _
      $region22: #{tpu_custom_call.1} parent=5 // pred_check_branch
        %125 = sbr.rel (%p122) target = $region24
      $region23: #{tpu_custom_call.1} parent=5 // pred_region
        %s126 = ssub.s32 %s10, 1
        %s127 = sand.u32 %s37, 1
        %s128 = scalar_lea.sflag [#allocation3], %s127
        %s129 = sand.u32 %s37, 1
        %s130 = smul.addr %s129, 16
        %s131 = scalar_lea.vmem [#allocation2], %s130
        // Predicated region
        $region25: #{tpu_custom_call.1} parent=23 // pred_check
          %p132 = pneg %p50
        $region26: #{tpu_custom_call.1} parent=23 // pred_check_branch
          %134 = sbr.rel (%p132) target = $region28
        $region27: #{tpu_custom_call.1} parent=23 // pred_region
          %136 = dma.done %s128, 256
        $region28: #{tpu_custom_call.1} parent=23 // pred_fallthru
          _
        %s137 = sand.u32 %s37, 1
        %s138 = scalar_lea.sflag [#allocation3], %s137
        %s139 = sand.u32 %s37, 1
        %s140 = smul.addr %s139, 16
        %s141 = scalar_lea.vmem [#allocation2], %s140
        %p142 = pneg %p50
        %p143 = pneg %p47
        %p144 = pneg %p78
        %p145 = pneg %p75
        %p146 = scmp.lt.s32.totalorder %s19, 1
        %s147 = scalar_select %p146, %s19, 1
        %p148 = scmp.lt.s32.totalorder %s20, 0
        %s149 = scalar_select %p148, %s20, 0
        %s150 = smul.addr %s147, 2
        %s151 = sadd.s32 %s149, %s150
        %s152 = smul.addr %s151, 8
        %s153 = scalar_lea.vmem %s1, %s152
        %p154 = scmp.lt.s32.totalorder %s19, 1
        %s155 = scalar_select %p154, %s19, 1
        %p156 = scmp.lt.s32.totalorder %s20, 0
        %s157 = scalar_select %p156, %s20, 0
        %s158 = smul.addr %s155, 2
        %s159 = sadd.s32 %s157, %s158
        %s160 = smul.addr %s159, 8
        %s161 = scalar_lea.vmem %s1, %s160
        %v162 = vld [vmem:[%s131] sm:$0xff]
        %v163 = vld [vmem:[%s131 + $0x8] sm:$0x1f]
        %v164 = vld [vmem:[%s131 + $0x1] sm:$0xff]
        %v165 = vld [vmem:[%s131 + $0x9] sm:$0x1f]
        %v166 = vadd.f32 %v162, %v164
        %v167 = vadd.f32 %v163, %v165
        %v168 = vld [vmem:[%s131 + $0x2] sm:$0xff]
        %v169 = vld [vmem:[%s131 + $0xa] sm:$0x1f]
        %v170 = vadd.f32 %v166, %v168
        %v171 = vadd.f32 %v167, %v169
        %v172 = vld [vmem:[%s131 + $0x3] sm:$0xff]
        %v173 = vld [vmem:[%s131 + $0xb] sm:$0x1f]
        %v174 = vadd.f32 %v170, %v172
        %v175 = vadd.f32 %v171, %v173
        %v176 = vmul.f32 %v174, 0.25
        %v177 = vmul.f32 %v175, 0.25
        %178 = vst [vmem:[%s161] sm:$0xff] %v176
        %179 = vst [vmem:[%s161 + $0x8] sm:$0x1f] %v177
        %p180 = scmp.lt.s32.totalorder %s19, 1
        %s181 = scalar_select %p180, %s19, 1
        %p182 = scmp.lt.s32.totalorder %s20, 0
        %s183 = scalar_select %p182, %s20, 0
        %s184 = smul.addr %s181, 2
        %s185 = sadd.s32 %s183, %s184
        %s186 = smul.addr %s185, 8
        %s187 = scalar_lea.vmem %s1, %s186
        // Predicated region
        $region29: #{tpu_custom_call.1} parent=23 // pred_check
          %p188 = pneg %p75
        $region30: #{tpu_custom_call.1} parent=23 // pred_check_branch
          %190 = sbr.rel (%p188) target = $region32
        $region31: #{tpu_custom_call.1} parent=23 // pred_region
          _
        $region32: #{tpu_custom_call.1} parent=23 // pred_fallthru
          _
      $region24: #{tpu_custom_call.1} parent=5 // pred_fallthru
        _
      %p191 = scmp.le.s32.totalorder 2, %s10
      // Predicated region
      $region33: #{tpu_custom_call.1} parent=5 // pred_check
        %p192 = pneg %p191
      $region34: #{tpu_custom_call.1} parent=5 // pred_check_branch
        %194 = sbr.rel (%p192) target = $region36
      $region35: #{tpu_custom_call.1} parent=5 // pred_region
        %s195 = ssub.s32 %s10, 2
        // Predicated region
        $region37: #{tpu_custom_call.1} parent=35 // pred_check
          %p196 = pneg %p81
        $region38: #{tpu_custom_call.1} parent=35 // pred_check_branch
          %198 = sbr.rel (%p196) target = $region40
        $region39: #{tpu_custom_call.1} parent=35 // pred_region
          %p199 = scmp.lt.s32.totalorder %s21, 1
          %s200 = scalar_select %p199, %s21, 1
          %p201 = scmp.lt.s32.totalorder %s22, 0
          %s202 = scalar_select %p201, %s22, 0
          %s203 = smul.addr %s200, 2
          %s204 = sadd.s32 %s202, %s203
          %s205 = smul.addr %s204, 8
          %s206 = scalar_lea.vmem %s1, %s205
        $region40: #{tpu_custom_call.1} parent=35 // pred_fallthru
          _
      $region36: #{tpu_custom_call.1} parent=5 // pred_fallthru
        _
    $region6: #{tpu_custom_call.1} parent=1 // loop_footer
      %s14 = sadd.s32 1, %s10
    $region7: #{tpu_custom_call.1} parent=1 // loop_footer_branch
      %9 = sbr.rel target = $region3
    $region8: #{tpu_custom_call.1} parent=1 // loop_exit
      _
    %207 = vsyncpa [#allocation3], 1
    %s208 = scalar_lea.sflag [#allocation3], 1
    %209 = vsyncpa %s208, 1

</llo_original>
